<compile_context>
chip_gen: v7x
topology: tpu7x:2x2x1
jax: 0.10.0
libtpu: 0.0.40
codegen_flags: <defaults>
</compile_context>

<pallas_src>
import functools
import math

import jax
import jax.numpy as jnp
from jax import lax
from jax.experimental import pallas as pl
from jax.experimental.pallas import tpu as pltpu

# Contract last axis of LHS with last axis of RHS (no batch dims) == A @ B.T on 2-D.
_CONTRACT_LAST = (((1,), (1,)), ((), ()))


def _cross_attention_kernel(latent_ref, text_ref, wq_ref, wkv_ref, o_ref, *,
                            d_k, inv_sqrt_dk):
    """One head per grid step. All operands VMEM-resident; f32 accumulation on MXU."""
    compute_dtype = latent_ref.dtype  # f32, or bf16 when mxu_dtype=bf16 (v6e/v7x)

    # Q projection. Fold 1/sqrt(d_k) into the (N_lat, d_k) activations -- the smallest
    # tensor on the score path -- instead of the (N_lat, N_txt) scores.
    q = lax.dot_general(latent_ref[...], wq_ref[...], _CONTRACT_LAST,
                        preferred_element_type=jnp.float32) * inv_sqrt_dk   # (N_lat, d_k) f32

    # Fused K/V projection: one wide MXU pass, then a static lane split.
    kv = lax.dot_general(text_ref[...], wkv_ref[...], _CONTRACT_LAST,
                         preferred_element_type=jnp.float32)                # (N_txt, d_k+d_v) f32
    k = kv[:, :d_k]                                                         # (N_txt, d_k)
    v = kv[:, d_k:]                                                         # (N_txt, d_v)

    # Scores: contract the shared d_k axis (no k.T materialization). MXU operands are
    # fed in compute_dtype (bf16 on v6e/v7x path), accumulation stays f32.
    s = lax.dot_general(q.astype(compute_dtype), k.astype(compute_dtype),
                        _CONTRACT_LAST, preferred_element_type=jnp.float32)  # (N_lat, N_txt)

    # Numerically-stable softmax over the text axis -- kept in f32 on all chips
    # (v5e VPU/EUP have no bf16 path).
    s = s - jnp.max(s, axis=-1, keepdims=True)
    p = jnp.exp(s)
    # approx=True lowers to the EUP reciprocal slot (otherwise idle) -- effectively free.
    p = p * pl.reciprocal(jnp.sum(p, axis=-1, keepdims=True), approx=True)

    # Weighted sum of values; p(dim 1) already lines up with v(dim 0).
    o = jnp.dot(p.astype(compute_dtype), v.astype(compute_dtype),
                preferred_element_type=jnp.float32)
    o_ref[...] = o.astype(o_ref.dtype)


def multihead_cross_attention(latent, text, wq, wk, wv, *, mxu_dtype=None):
    """
    latent: (N_latent, latent_size)
    text:   (N_text,  queried_array_size)
    wq: (H, d_k, latent_size)           -- PyTorch nn.Linear weight layout (out, in), stacked per head
    wk: (H, d_k, queried_array_size)
    wv: (H, d_v, queried_array_size)
    mxu_dtype: optional dtype (e.g. jnp.bfloat16) to feed the MXU on v6e/v7x.
    returns: (H, N_latent, d_v), float32
    """
    num_heads, d_k, latent_size = wq.shape
    d_v = wv.shape[1]
    n_latent = latent.shape[0]
    n_text, queried_size = text.shape

    # Fuse K and V projection weights once, outside the hot path.
    wkv = jnp.concatenate([wk, wv], axis=1)                     # (H, d_k + d_v, S)

    if mxu_dtype is not None:
        latent = latent.astype(mxu_dtype)
        text = text.astype(mxu_dtype)
        wq = wq.astype(mxu_dtype)
        wkv = wkv.astype(mxu_dtype)

    # Advisory cost model so XLA can schedule/overlap around the custom call.
    flops = 2 * num_heads * (n_latent * latent_size * d_k            # Q projection
                             + n_text * queried_size * (d_k + d_v)   # fused K/V projection
                             + n_latent * n_text * d_k               # Q @ K^T
                             + n_latent * n_text * d_v)              # A @ V
    bytes_accessed = (latent.size * latent.dtype.itemsize
                      + text.size * text.dtype.itemsize
                      + wq.size * wq.dtype.itemsize
                      + wkv.size * wkv.dtype.itemsize
                      + num_heads * n_latent * d_v * 4)
    cost = pl.CostEstimate(flops=flops,
                           transcendentals=num_heads * n_latent * n_text,  # exp per score
                           bytes_accessed=bytes_accessed)

    kernel = functools.partial(_cross_attention_kernel,
                               d_k=d_k, inv_sqrt_dk=1.0 / math.sqrt(d_k))

    return pl.pallas_call(
        kernel,
        out_shape=jax.ShapeDtypeStruct((num_heads, n_latent, d_v), jnp.float32),
        grid=(num_heads,),
        in_specs=[
            # latent/text: constant block index -> stay VMEM-resident across heads.
            pl.BlockSpec((n_latent, latent_size), lambda h: (0, 0)),
            pl.BlockSpec((n_text, queried_size), lambda h: (0, 0)),
            # Per-head weights (leading head dim squeezed out of the kernel refs).
            pl.BlockSpec((None, d_k, latent_size), lambda h: (h, 0, 0)),
            pl.BlockSpec((None, d_k + d_v, queried_size), lambda h: (h, 0, 0)),
        ],
        out_specs=pl.BlockSpec((None, n_latent, d_v), lambda h: (h, 0, 0)),
        compiler_params=pltpu.CompilerParams(dimension_semantics=("parallel",)),
        cost_estimate=cost,
    )(latent, text, wq, wkv)


def cross_attention_head(latent, text, wq, wk, wv, *, mxu_dtype=None):
    """Module-faithful single-head API (the PyTorch `cross_attention_head.forward`)."""
    out = multihead_cross_attention(latent, text, wq[None], wk[None], wv[None],
                                    mxu_dtype=mxu_dtype)
    return out[0]


def _reference_head(latent, text, wq, wk, wv):
    d_k = wq.shape[0]
    q = latent @ wq.T
    k = text @ wk.T
    v = text @ wv.T
    s = (q @ k.T) / math.sqrt(d_k)
    p = jax.nn.softmax(s, axis=1)
    return p @ v


if __name__ == "__main__":
    # Module hyperparameters: small but lane/sublane aligned (full-width MXU passes,
    # unmasked lane-dense output stores).
    latent_size = 128
    queried_array_size = 128
    d_k = 128
    d_v = 128
    n_latent = 8       # number of latent rows  (f32 sublane multiple)
    n_text = 128       # number of text rows
    num_heads = 4      # batched-heads demo; the module itself is one head

    key = jax.random.PRNGKey(0)
    k_lat, k_txt, k_wq, k_wk, k_wv = jax.random.split(key, 5)

    latent = jax.random.normal(k_lat, (n_latent, latent_size), dtype=jnp.float32)
    text = jax.random.normal(k_txt, (n_text, queried_array_size), dtype=jnp.float32)

    # PyTorch nn.Linear weight shape (out_features, in_features), stacked per head.
    wq = jax.random.normal(k_wq, (num_heads, d_k, latent_size), dtype=jnp.float32) * 0.1
    wk = jax.random.normal(k_wk, (num_heads, d_k, queried_array_size), dtype=jnp.float32) * 0.1
    wv = jax.random.normal(k_wv, (num_heads, d_v, queried_array_size), dtype=jnp.float32) * 0.1

    # 1) Single head (exact module semantics), f32 MXU operands -> tight tolerance.
    out1 = cross_attention_head(latent, text, wq[0], wk[0], wv[0])
    out1 = jax.block_until_ready(out1)
    ref1 = _reference_head(latent, text, wq[0], wk[0], wv[0])
    assert out1.shape == (n_latent, d_v)
    # Tolerance accounts for the EUP approximate-reciprocal softmax denominator.
    assert jnp.allclose(out1, ref1, atol=3e-3, rtol=3e-3), "single-head mismatch vs reference"

    # 2) All heads in one grid-parallel pallas_call, f32.
    out_mh = multihead_cross_attention(latent, text, wq, wk, wv)
    out_mh = jax.block_until_ready(out_mh)
    ref_mh = jnp.stack([_reference_head(latent, text, wq[h], wk[h], wv[h])
                        for h in range(num_heads)])
    assert out_mh.shape == (num_heads, n_latent, d_v)
    assert jnp.allclose(out_mh, ref_mh, atol=3e-3, rtol=3e-3), "multi-head mismatch vs reference"

    # 3) bf16 MXU-operand path (v6e/v7x); softmax/accumulation stay f32. Loose check only --
    #    strict numerical parity with the PyTorch module is the f32 tests above.
    out_bf16 = multihead_cross_attention(latent, text, wq, wk, wv, mxu_dtype=jnp.bfloat16)
    out_bf16 = jax.block_until_ready(out_bf16)
    assert jnp.allclose(out_bf16, ref_mh, atol=1e-1, rtol=1e-1), "bf16 path mismatch vs reference"

    print("KERNEL_OK")
</pallas_src>

<mosaic_0001>
module attributes {stable_mosaic.version = 11 : i64} {
  func.func @_cross_attention_kernel(%arg0: i32, %arg1: memref<8x128xf32, #tpu.memory_space<vmem>>, %arg2: memref<128x128xf32, #tpu.memory_space<vmem>>, %arg3: memref<1x128x128xf32, #tpu.memory_space<vmem>>, %arg4: memref<1x256x128xf32, #tpu.memory_space<vmem>>, %arg5: memref<1x8x128xf32, #tpu.memory_space<vmem>>) attributes {dimension_semantics = [#tpu.dimension_semantics<parallel>], iteration_bounds = array<i64: 1>, scalar_prefetch = 0 : i64, scratch_operands = 0 : i64, tpu.core_type = #tpu.core_type<tc>, window_params = [{pipeline_mode = #tpu.pipeline_mode<synchronous>, transform_indices = @transform_0, window_bounds = array<i64: 8, 128>}, {pipeline_mode = #tpu.pipeline_mode<synchronous>, transform_indices = @transform_1, window_bounds = array<i64: 128, 128>}, {transform_indices = @transform_2, window_bounds = array<i64: 1, 128, 128>}, {transform_indices = @transform_3, window_bounds = array<i64: 1, 256, 128>}, {transform_indices = @transform_4, window_bounds = array<i64: 1, 8, 128>}]} {
    %c0 = arith.constant 0 : index
    %c0_0 = arith.constant 0 : index
    %0 = vector.load %arg1[%c0, %c0_0] : memref<8x128xf32, #tpu.memory_space<vmem>>, vector<8x128xf32>
    %c0_1 = arith.constant 0 : index
    %c0_2 = arith.constant 0 : index
    %c0_3 = arith.constant 0 : index
    %1 = vector.load %arg3[%c0_1, %c0_2, %c0_3] : memref<1x128x128xf32, #tpu.memory_space<vmem>>, vector<1x128x128xf32>
    %2 = vector.shape_cast %1 : vector<1x128x128xf32> to vector<128x128xf32>
    %cst = arith.constant dense<0.000000e+00> : vector<8x128xf32>
    %3 = tpu.matmul %0, %2, %cst {dimension_numbers = #tpu.dot_dimension_numbers<[1], [1], [0], [0], [0, 0, 1, 0], [], []>} : vector<8x128xf32>, vector<128x128xf32>, vector<8x128xf32> -> vector<8x128xf32>
    %cst_4 = arith.constant 0.0883883461 : f32
    %4 = vector.broadcast %cst_4 : f32 to vector<8x128xf32>
    %5 = arith.mulf %3, %4 : vector<8x128xf32>
    %c0_5 = arith.constant 0 : index
    %c0_6 = arith.constant 0 : index
    %6 = vector.load %arg2[%c0_5, %c0_6] : memref<128x128xf32, #tpu.memory_space<vmem>>, vector<128x128xf32>
    %c0_7 = arith.constant 0 : index
    %c0_8 = arith.constant 0 : index
    %c0_9 = arith.constant 0 : index
    %7 = vector.load %arg4[%c0_7, %c0_8, %c0_9] : memref<1x256x128xf32, #tpu.memory_space<vmem>>, vector<1x256x128xf32>
    %8 = vector.shape_cast %7 : vector<1x256x128xf32> to vector<256x128xf32>
    %cst_10 = arith.constant dense<0.000000e+00> : vector<128x256xf32>
    %9 = tpu.matmul %6, %8, %cst_10 {dimension_numbers = #tpu.dot_dimension_numbers<[1], [1], [0], [0], [0, 0, 1, 0], [], []>} : vector<128x128xf32>, vector<256x128xf32>, vector<128x256xf32> -> vector<128x256xf32>
    %10 = vector.extract_strided_slice %9 {offsets = [0, 0], sizes = [128, 128], strides = [1, 1]} : vector<128x256xf32> to vector<128x128xf32>
    %11 = vector.extract_strided_slice %9 {offsets = [0, 128], sizes = [128, 128], strides = [1, 1]} : vector<128x256xf32> to vector<128x128xf32>
    %cst_11 = arith.constant dense<0.000000e+00> : vector<8x128xf32>
    %12 = tpu.matmul %5, %10, %cst_11 {dimension_numbers = #tpu.dot_dimension_numbers<[1], [1], [0], [0], [0, 0, 1, 0], [], []>} : vector<8x128xf32>, vector<128x128xf32>, vector<8x128xf32> -> vector<8x128xf32>
    %cst_12 = arith.constant dense<0xFF800000> : vector<8xf32>
    %13 = vector.multi_reduction <maximumf>, %12, %cst_12 [1] : vector<8x128xf32> to vector<8xf32>
    %14 = vector.shape_cast %13 : vector<8xf32> to vector<8x1xf32>
    %15 = vector.broadcast %14 : vector<8x1xf32> to vector<8x128xf32>
    %16 = arith.subf %12, %15 : vector<8x128xf32>
    %17 = math.exp %16 : vector<8x128xf32>
    %cst_13 = arith.constant dense<0.000000e+00> : vector<8xf32>
    %18 = vector.multi_reduction <add>, %17, %cst_13 [1] : vector<8x128xf32> to vector<8xf32>
    %19 = vector.shape_cast %18 : vector<8xf32> to vector<8x1xf32>
    %20 = tpu.reciprocal %19 {approx = true} : vector<8x1xf32> -> vector<8x1xf32>
    %21 = vector.broadcast %20 : vector<8x1xf32> to vector<8x128xf32>
    %22 = arith.mulf %17, %21 : vector<8x128xf32>
    %cst_14 = arith.constant dense<0.000000e+00> : vector<8x128xf32>
    %23 = tpu.matmul %22, %11, %cst_14 {dimension_numbers = #tpu.dot_dimension_numbers<[1], [0], [0], [1], [0, 0, 1, 1], [], []>} : vector<8x128xf32>, vector<128x128xf32>, vector<8x128xf32> -> vector<8x128xf32>
    %c0_15 = arith.constant 0 : index
    %c0_16 = arith.constant 0 : index
    %c0_17 = arith.constant 0 : index
    %24 = vector.load %arg5[%c0_15, %c0_16, %c0_17] : memref<1x8x128xf32, #tpu.memory_space<vmem>>, vector<1x8x128xf32>
    %25 = vector.shape_cast %24 : vector<1x8x128xf32> to vector<8x128xf32>
    %26 = vector.shape_cast %23 : vector<8x128xf32> to vector<1x8x128xf32>
    tpu.vector_store %arg5[%c0_15, %c0_16, %c0_17], %26 {strides = array<i32>} : memref<1x8x128xf32, #tpu.memory_space<vmem>>, vector<1x8x128xf32>,
    return
  }
  func.func @transform_0(%arg0: i32) -> (i32, i32) {
    %c0_i32 = arith.constant 0 : i32
    %c0_i32_0 = arith.constant 0 : i32
    %c0_i32_1 = arith.constant 0 : i32
    return %c0_i32, %c0_i32_0 : i32, i32
  }
  func.func @transform_1(%arg0: i32) -> (i32, i32) {
    %c0_i32 = arith.constant 0 : i32
    %c0_i32_0 = arith.constant 0 : i32
    %c0_i32_1 = arith.constant 0 : i32
    return %c0_i32, %c0_i32_0 : i32, i32
  }
  func.func @transform_2(%arg0: i32) -> (i32, i32, i32) {
    %c0_i32 = arith.constant 0 : i32
    %c0_i32_0 = arith.constant 0 : i32
    %c0_i32_1 = arith.constant 0 : i32
    return %arg0, %c0_i32, %c0_i32_0 : i32, i32, i32
  }
  func.func @transform_3(%arg0: i32) -> (i32, i32, i32) {
    %c0_i32 = arith.constant 0 : i32
    %c0_i32_0 = arith.constant 0 : i32
    %c0_i32_1 = arith.constant 0 : i32
    return %arg0, %c0_i32, %c0_i32_0 : i32, i32, i32
  }
  func.func @transform_4(%arg0: i32) -> (i32, i32, i32) {
    %c0_i32 = arith.constant 0 : i32
    %c0_i32_0 = arith.constant 0 : i32
    %c0_i32_1 = arith.constant 0 : i32
    return %arg0, %c0_i32, %c0_i32_0 : i32, i32, i32
  }
}

</mosaic_0001>

<llo_original>
// kernel: tpu_custom_call.1
$region0: #{tpu_custom_call.1}
  #allocation0 [shape = 'u32[]', space=smem, size = 0x4, offset = 0x4, fixed_abs, tag = 'smem constant byte address 0x4 - core index']
  #allocation1 [shape = 'u32[144,128]{1,0:T(1,128)}', space=vmem, size = 0x12000, scoped, tag = 'internal scratch']
  %s0 = inlined_call_operand.hbm [shape: f32[8,128], index: 0, kind: input, shape index: {}]
  %s1 = inlined_call_operand.hbm [shape: f32[128,128], index: 1, kind: input, shape index: {}]
  %s2 = inlined_call_operand.hbm [shape: f32[1,128,128], index: 2, kind: input, shape index: {}]
  %s3 = inlined_call_operand.hbm [shape: f32[1,256,128], index: 3, kind: input, shape index: {}]
  %s4 = inlined_call_operand.hbm [shape: f32[1,8,128], index: 4, kind: output, shape index: {}]
  %s5 = sld [smem:[#allocation0]]
  $region42: #{tpu_custom_call.1} parent=0
    _
  %s7 = ssub.s32 1, %s5
  %s8 = scalar_select 0, %s7, %s5
  $region1: #{tpu_custom_call.1} parent=0
    #allocation2 [shape = 'u8[4096]{0}', space=vmem, size = 0x1000, scoped, tag = 'input window, operand 0, single buffered']
    #allocation3 [shape = 's32[1]{0}', space=sflag, size = 0x4, scoped, tag = 'scoped memory for tpu_custom_call.1']
    #allocation4 [shape = 's32[1]{0}', space=sflag, size = 0x4, scoped, tag = 'scoped memory for tpu_custom_call.1']
    #allocation5 [shape = 'u8[65536]{0}', space=vmem, size = 0x10000, scoped, tag = 'input window, operand 1, single buffered']
    #allocation6 [shape = 's32[1]{0}', space=sflag, size = 0x4, scoped, tag = 'scoped memory for tpu_custom_call.1']
    #allocation7 [shape = 'u8[65536]{0}', space=vmem, size = 0x10000, scoped, tag = 'input window, operand 2, single buffered']
    #allocation8 [shape = 'u8[131072]{0}', space=vmem, size = 0x20000, scoped, tag = 'input window, operand 3, single buffered']
    #allocation9 [shape = 's32[1]{0}', space=sflag, size = 0x4, scoped, tag = 'scoped memory for tpu_custom_call.1']
    #allocation10 [shape = 'u8[4096]{0}', space=vmem, size = 0x1000, scoped, tag = 'output window, operand 0, single buffered']
    %9 = vsyncpa [#allocation3], 0
    %10 = vsyncpa [#allocation6], 0
    %11 = vsyncpa [#allocation9], 0
    %12 = vsyncpa [#allocation4], 0
    // Predicated region
    $region2: #{tpu_custom_call.1} parent=1 // pred_check
      _
    $region3: #{tpu_custom_call.1} parent=1 // pred_check_branch
      %14 = sbr.rel (0) target = $region5
    $region4: #{tpu_custom_call.1} parent=1 // pred_region
      %s16 = ssub.s32 128, 128
      %17 = vsyncadd [#allocation3], %s16
      %s19 = sshll.u32 [#allocation2], 4
      %s20 = int_to_ptr.vmem [resolvable:$true] %s19
      %22 = dma.hbm_to_vmem [thread:$0]  %s0, 128, %s20, [#allocation3]
    $region5: #{tpu_custom_call.1} parent=1 // pred_fallthru
      _
    // Predicated region
    $region6: #{tpu_custom_call.1} parent=1 // pred_check
      _
    $region7: #{tpu_custom_call.1} parent=1 // pred_check_branch
      %24 = sbr.rel (0) target = $region9
    $region8: #{tpu_custom_call.1} parent=1 // pred_region
      %s26 = ssub.s32 2048, 2048
      %27 = vsyncadd [#allocation6], %s26
      %s28 = sshll.u32 [#allocation5], 4
      %s29 = int_to_ptr.vmem [resolvable:$true] %s28
      %34 = dma.hbm_to_vmem [thread:$0]  %s1, 2048, %s29, [#allocation6], 128, 128, 8
    $region9: #{tpu_custom_call.1} parent=1 // pred_fallthru
      _
    // Predicated region
    $region10: #{tpu_custom_call.1} parent=1 // pred_check
      _
    $region11: #{tpu_custom_call.1} parent=1 // pred_check_branch
      %36 = sbr.rel (0) target = $region13
    $region12: #{tpu_custom_call.1} parent=1 // pred_region
      %s38 = ssub.s32 2048, 2048
      %39 = vsyncadd [#allocation6], %s38
      %s40 = sshll.u32 [#allocation7], 4
      %s41 = int_to_ptr.vmem [resolvable:$true] %s40
      %46 = dma.hbm_to_vmem [thread:$0]  %s2, 2048, %s41, [#allocation6], 128, 128, 8
    $region13: #{tpu_custom_call.1} parent=1 // pred_fallthru
      _
    // Predicated region
    $region14: #{tpu_custom_call.1} parent=1 // pred_check
      _
    $region15: #{tpu_custom_call.1} parent=1 // pred_check_branch
      %48 = sbr.rel (0) target = $region17
    $region16: #{tpu_custom_call.1} parent=1 // pred_region
      %s50 = ssub.s32 4096, 4096
      %51 = vsyncadd [#allocation9], %s50
      %s52 = sshll.u32 [#allocation8], 4
      %s53 = int_to_ptr.vmem [resolvable:$true] %s52
      %58 = dma.hbm_to_vmem [thread:$0]  %s3, 4096, %s53, [#allocation9], 128, 128, 8
    $region17: #{tpu_custom_call.1} parent=1 // pred_fallthru
      _
    // Predicated region
    $region18: #{tpu_custom_call.1} parent=1 // pred_check
      _
    $region19: #{tpu_custom_call.1} parent=1 // pred_check_branch
      %60 = sbr.rel (0) target = $region21
    $region20: #{tpu_custom_call.1} parent=1 // pred_region
      %61 = dma.done [#allocation3], 128
    $region21: #{tpu_custom_call.1} parent=1 // pred_fallthru
      _
    // Predicated region
    $region22: #{tpu_custom_call.1} parent=1 // pred_check
      _
    $region23: #{tpu_custom_call.1} parent=1 // pred_check_branch
      %63 = sbr.rel (0) target = $region25
    $region24: #{tpu_custom_call.1} parent=1 // pred_region
      %64 = dma.done [#allocation6], 2048
    $region25: #{tpu_custom_call.1} parent=1 // pred_fallthru
      _
    // Predicated region
    $region26: #{tpu_custom_call.1} parent=1 // pred_check
      _
    $region27: #{tpu_custom_call.1} parent=1 // pred_check_branch
      %66 = sbr.rel (0) target = $region29
    $region28: #{tpu_custom_call.1} parent=1 // pred_region
      %67 = dma.done [#allocation6], 2048
    $region29: #{tpu_custom_call.1} parent=1 // pred_fallthru
      _
    // Predicated region
    $region30: #{tpu_custom_call.1} parent=1 // pred_check
      _
    $region31: #{tpu_custom_call.1} parent=1 // pred_check_branch
      %69 = sbr.rel (0) target = $region33
    $region32: #{tpu_custom_call.1} parent=1 // pred_region
      %70 = dma.done [#allocation9], 4096
    $region33: #{tpu_custom_call.1} parent=1 // pred_fallthru
      _
    %v71 = vld [vmem:[#allocation2] sm:$0xff]
    %v72 = vld [vmem:[#allocation7] sm:$0xff]
    %v73 = vld [vmem:[#allocation7 + $0x8] sm:$0xff]
    %v74 = vld [vmem:[#allocation7 + $0x10] sm:$0xff]
    %v75 = vld [vmem:[#allocation7 + $0x18] sm:$0xff]
    %v76 = vld [vmem:[#allocation7 + $0x20] sm:$0xff]
    %v77 = vld [vmem:[#allocation7 + $0x28] sm:$0xff]
    %v78 = vld [vmem:[#allocation7 + $0x30] sm:$0xff]
    %v79 = vld [vmem:[#allocation7 + $0x38] sm:$0xff]
    %v80 = vld [vmem:[#allocation7 + $0x40] sm:$0xff]
    %v81 = vld [vmem:[#allocation7 + $0x48] sm:$0xff]
    %v82 = vld [vmem:[#allocation7 + $0x50] sm:$0xff]
    %v83 = vld [vmem:[#allocation7 + $0x58] sm:$0xff]
    %v84 = vld [vmem:[#allocation7 + $0x60] sm:$0xff]
    %v85 = vld [vmem:[#allocation7 + $0x68] sm:$0xff]
    %v86 = vld [vmem:[#allocation7 + $0x70] sm:$0xff]
    %v87 = vld [vmem:[#allocation7 + $0x78] sm:$0xff]
    %88 = vmatprep.subr.mxu0 0.0
    %89 = vmatpush1.xpose.msra.mxu0 %v72
    %90 = vmatprep.subr.mxu0 0.0
    %91 = vmatpush1.xpose.msra.mxu0 %v73
    %92 = vmatprep.subr.mxu0 0.0
    %93 = vmatpush1.xpose.msra.mxu0 %v74
    %94 = vmatprep.subr.mxu0 0.0
    %95 = vmatpush1.xpose.msra.mxu0 %v75
    %96 = vmatprep.subr.mxu0 0.0
    %97 = vmatpush1.xpose.msra.mxu0 %v76
    %98 = vmatprep.subr.mxu0 0.0
    %99 = vmatpush1.xpose.msra.mxu0 %v77
    %100 = vmatprep.subr.mxu0 0.0
    %101 = vmatpush1.xpose.msra.mxu0 %v78
    %102 = vmatprep.subr.mxu0 0.0
    %103 = vmatpush1.xpose.msra.mxu0 %v79
    %104 = vmatprep.subr.mxu0 0.0
    %105 = vmatpush1.xpose.msra.mxu0 %v80
    %106 = vmatprep.subr.mxu0 0.0
    %107 = vmatpush1.xpose.msra.mxu0 %v81
    %108 = vmatprep.subr.mxu0 0.0
    %109 = vmatpush1.xpose.msra.mxu0 %v82
    %110 = vmatprep.subr.mxu0 0.0
    %111 = vmatpush1.xpose.msra.mxu0 %v83
    %112 = vmatprep.subr.mxu0 0.0
    %113 = vmatpush1.xpose.msra.mxu0 %v84
    %114 = vmatprep.subr.mxu0 0.0
    %115 = vmatpush1.xpose.msra.mxu0 %v85
    %116 = vmatprep.subr.mxu0 0.0
    %117 = vmatpush1.xpose.msra.mxu0 %v86
    %118 = vmatprep.subr.mxu0 0.0
    %119 = vmatpush1.xpose.msra.mxu0 %v87
    %120 = vmatprep.subr.mxu0 0.0
    %121 = vmatpush1.xpose.msra.mxu0 0.0
    %122 = vmatprep.subr.mxu0 0.0
    %123 = vmatpush1.xpose.msra.mxu0 0.0
    %124 = vmatprep.subr.mxu0 0.0
    %125 = vmatpush1.xpose.msra.mxu0 0.0
    %126 = vmatprep.subr.mxu0 0.0
    %127 = vmatpush1.xpose.msra.mxu0 0.0
    %128 = vmatprep.subr.mxu0 0.0
    %129 = vmatpush1.xpose.msra.mxu0 0.0
    %130 = vmatprep.subr.mxu0 0.0
    %131 = vmatpush1.xpose.msra.mxu0 0.0
    %132 = vmatprep.subr.mxu0 0.0
    %133 = vmatpush1.xpose.msra.mxu0 0.0
    %134 = vmatprep.subr.mxu0 0.0
    %135 = vmatpush1.xpose.msra.mxu0 0.0
    %136 = vmatprep.subr.mxu0 0.0
    %137 = vmatpush1.xpose.msra.mxu0 0.0
    %138 = vmatprep.subr.mxu0 0.0
    %139 = vmatpush1.xpose.msra.mxu0 0.0
    %140 = vmatprep.subr.mxu0 0.0
    %141 = vmatpush1.xpose.msra.mxu0 0.0
    %142 = vmatprep.subr.mxu0 0.0
    %143 = vmatpush1.xpose.msra.mxu0 0.0
    %144 = vmatprep.subr.mxu0 0.0
    %145 = vmatpush1.xpose.msra.mxu0 0.0
    %146 = vmatprep.subr.mxu0 0.0
    %147 = vmatpush1.xpose.msra.mxu0 0.0
    %148 = vmatprep.subr.mxu0 0.0
    %149 = vmatpush1.xpose.msra.mxu0 0.0
    %150 = vmatprep.subr.mxu0 0.0
    %151 = vmatpush1.xpose.msra.mxu0 0.0
    %152 = vmatprep.mubr.f32.mxu0 0.0
    %153 = vmatmul.mubr.f32.gmra.mrb[0].mxu0 %v71
    %v154 = vpop.f32.mrb[0].mxu0
    %v155 = vadd.f32 0.0, %v154
    %v156 = vpop.f32.mrb[0].mxu0
    %157 = vdwg.mxu0
    %v158 = vmul.f32 %v155, 0.088388346
    %v159 = vld [vmem:[#allocation5] sm:$0xff]
    %v160 = vld [vmem:[#allocation5 + $0x8] sm:$0xff]
    %v161 = vld [vmem:[#allocation5 + $0x10] sm:$0xff]
    %v162 = vld [vmem:[#allocation5 + $0x18] sm:$0xff]
    %v163 = vld [vmem:[#allocation5 + $0x20] sm:$0xff]
    %v164 = vld [vmem:[#allocation5 + $0x28] sm:$0xff]
    %v165 = vld [vmem:[#allocation5 + $0x30] sm:$0xff]
    %v166 = vld [vmem:[#allocation5 + $0x38] sm:$0xff]
    %v167 = vld [vmem:[#allocation5 + $0x40] sm:$0xff]
    %v168 = vld [vmem:[#allocation5 + $0x48] sm:$0xff]
    %v169 = vld [vmem:[#allocation5 + $0x50] sm:$0xff]
    %v170 = vld [vmem:[#allocation5 + $0x58] sm:$0xff]
    %v171 = vld [vmem:[#allocation5 + $0x60] sm:$0xff]
    %v172 = vld [vmem:[#allocation5 + $0x68] sm:$0xff]
    %v173 = vld [vmem:[#allocation5 + $0x70] sm:$0xff]
    %v174 = vld [vmem:[#allocation5 + $0x78] sm:$0xff]
    %v175 = vld [vmem:[#allocation8] sm:$0xff]
    %v176 = vld [vmem:[#allocation8 + $0x8] sm:$0xff]
    %v177 = vld [vmem:[#allocation8 + $0x10] sm:$0xff]
    %v178 = vld [vmem:[#allocation8 + $0x18] sm:$0xff]
    %v179 = vld [vmem:[#allocation8 + $0x20] sm:$0xff]
    %v180 = vld [vmem:[#allocation8 + $0x28] sm:$0xff]
    %v181 = vld [vmem:[#allocation8 + $0x30] sm:$0xff]
    %v182 = vld [vmem:[#allocation8 + $0x38] sm:$0xff]
    %v183 = vld [vmem:[#allocation8 + $0x40] sm:$0xff]
    %v184 = vld [vmem:[#allocation8 + $0x48] sm:$0xff]
    %v185 = vld [vmem:[#allocation8 + $0x50] sm:$0xff]
    %v186 = vld [vmem:[#allocation8 + $0x58] sm:$0xff]
    %v187 = vld [vmem:[#allocation8 + $0x60] sm:$0xff]
    %v188 = vld [vmem:[#allocation8 + $0x68] sm:$0xff]
    %v189 = vld [vmem:[#allocation8 + $0x70] sm:$0xff]
    %v190 = vld [vmem:[#allocation8 + $0x78] sm:$0xff]
    %v191 = vld [vmem:[#allocation8 + $0x80] sm:$0xff]
    %v192 = vld [vmem:[#allocation8 + $0x88] sm:$0xff]
    %v193 = vld [vmem:[#allocation8 + $0x90] sm:$0xff]
    %v194 = vld [vmem:[#allocation8 + $0x98] sm:$0xff]
    %v195 = vld [vmem:[#allocation8 + $0xa0] sm:$0xff]
    %v196 = vld [vmem:[#allocation8 + $0xa8] sm:$0xff]
    %v197 = vld [vmem:[#allocation8 + $0xb0] sm:$0xff]
    %v198 = vld [vmem:[#allocation8 + $0xb8] sm:$0xff]
    %v199 = vld [vmem:[#allocation8 + $0xc0] sm:$0xff]
    %v200 = vld [vmem:[#allocation8 + $0xc8] sm:$0xff]
    %v201 = vld [vmem:[#allocation8 + $0xd0] sm:$0xff]
    %v202 = vld [vmem:[#allocation8 + $0xd8] sm:$0xff]
    %v203 = vld [vmem:[#allocation8 + $0xe0] sm:$0xff]
    %v204 = vld [vmem:[#allocation8 + $0xe8] sm:$0xff]
    %v205 = vld [vmem:[#allocation8 + $0xf0] sm:$0xff]
    %v206 = vld [vmem:[#allocation8 + $0xf8] sm:$0xff]
    %207 = vmatprep.subr.mxu0 0.0
    %208 = vmatpush1.xpose.msra.mxu0 %v175
    %209 = vmatprep.subr.mxu0 0.0
    %210 = vmatpush1.xpose.msra.mxu0 %v176
    %211 = vmatprep.subr.mxu0 0.0
    %212 = vmatpush1.xpose.msra.mxu0 %v177
    %213 = vmatprep.subr.mxu0 0.0
    %214 = vmatpush1.xpose.msra.mxu0 %v178
    %215 = vmatprep.subr.mxu0 0.0
    %216 = vmatpush1.xpose.msra.mxu0 %v179
    %217 = vmatprep.subr.mxu0 0.0
    %218 = vmatpush1.xpose.msra.mxu0 %v180
    %219 = vmatprep.subr.mxu0 0.0
    %220 = vmatpush1.xpose.msra.mxu0 %v181
    %221 = vmatprep.subr.mxu0 0.0
    %222 = vmatpush1.xpose.msra.mxu0 %v182
    %223 = vmatprep.subr.mxu0 0.0
    %224 = vmatpush1.xpose.msra.mxu0 %v183
    %225 = vmatprep.subr.mxu0 0.0
    %226 = vmatpush1.xpose.msra.mxu0 %v184
    %227 = vmatprep.subr.mxu0 0.0
    %228 = vmatpush1.xpose.msra.mxu0 %v185
    %229 = vmatprep.subr.mxu0 0.0
    %230 = vmatpush1.xpose.msra.mxu0 %v186
    %231 = vmatprep.subr.mxu0 0.0
    %232 = vmatpush1.xpose.msra.mxu0 %v187
    %233 = vmatprep.subr.mxu0 0.0
    %234 = vmatpush1.xpose.msra.mxu0 %v188
    %235 = vmatprep.subr.mxu0 0.0
    %236 = vmatpush1.xpose.msra.mxu0 %v189
    %237 = vmatprep.subr.mxu0 0.0
    %238 = vmatpush1.xpose.msra.mxu0 %v190
    %239 = vmatprep.subr.mxu0 0.0
    %240 = vmatpush1.xpose.msra.mxu0 %v191
    %241 = vmatprep.subr.mxu0 0.0
    %242 = vmatpush1.xpose.msra.mxu0 %v192
    %243 = vmatprep.subr.mxu0 0.0
    %244 = vmatpush1.xpose.msra.mxu0 %v193
    %245 = vmatprep.subr.mxu0 0.0
    %246 = vmatpush1.xpose.msra.mxu0 %v194
    %247 = vmatprep.subr.mxu0 0.0
    %248 = vmatpush1.xpose.msra.mxu0 %v195
    %249 = vmatprep.subr.mxu0 0.0
    %250 = vmatpush1.xpose.msra.mxu0 %v196
    %251 = vmatprep.subr.mxu0 0.0
    %252 = vmatpush1.xpose.msra.mxu0 %v197
    %253 = vmatprep.subr.mxu0 0.0
    %254 = vmatpush1.xpose.msra.mxu0 %v198
    %255 = vmatprep.subr.mxu0 0.0
    %256 = vmatpush1.xpose.msra.mxu0 %v199
    %257 = vmatprep.subr.mxu0 0.0
    %258 = vmatpush1.xpose.msra.mxu0 %v200
    %259 = vmatprep.subr.mxu0 0.0
    %260 = vmatpush1.xpose.msra.mxu0 %v201
    %261 = vmatprep.subr.mxu0 0.0
    %262 = vmatpush1.xpose.msra.mxu0 %v202
    %263 = vmatprep.subr.mxu0 0.0
    %264 = vmatpush1.xpose.msra.mxu0 %v203
    %265 = vmatprep.subr.mxu0 0.0
    %266 = vmatpush1.xpose.msra.mxu0 %v204
    %267 = vmatprep.subr.mxu0 0.0
    %268 = vmatpush1.xpose.msra.mxu0 %v205
    %269 = vmatprep.subr.mxu0 0.0
    %270 = vmatpush1.xpose.msra.mxu0 %v206
    %271 = vmatprep.mubr.f32.mxu0 0.0
    %272 = vmatmul.mubr.f32.gmra.mrb[0].mxu0 %v159
    %v273 = vpop.f32.mrb[0].mxu0
    %v274 = vadd.f32 0.0, %v273
    %v275 = vpop.f32.mrb[0].mxu0
    %v276 = vadd.f32 0.0, %v275
    %277 = vmatprep.mubr.f32.mxu0 0.0
    %278 = vmatmul.mubr.f32.gmra.mrb[0].mxu0 %v160
    %v279 = vpop.f32.mrb[0].mxu0
    %v280 = vadd.f32 0.0, %v279
    %v281 = vpop.f32.mrb[0].mxu0
    %v282 = vadd.f32 0.0, %v281
    %283 = vmatprep.mubr.f32.mxu0 0.0
    %284 = vmatmul.mubr.f32.gmra.mrb[0].mxu0 %v161
    %v285 = vpop.f32.mrb[0].mxu0
    %v286 = vadd.f32 0.0, %v285
    %v287 = vpop.f32.mrb[0].mxu0
    %v288 = vadd.f32 0.0, %v287
    %289 = vmatprep.mubr.f32.mxu0 0.0
    %290 = vmatmul.mubr.f32.gmra.mrb[0].mxu0 %v162
    %v291 = vpop.f32.mrb[0].mxu0
    %v292 = vadd.f32 0.0, %v291
    %v293 = vpop.f32.mrb[0].mxu0
    %v294 = vadd.f32 0.0, %v293
    %295 = vmatprep.mubr.f32.mxu0 0.0
    %296 = vmatmul.mubr.f32.gmra.mrb[0].mxu0 %v163
    %v297 = vpop.f32.mrb[0].mxu0
    %v298 = vadd.f32 0.0, %v297
    %v299 = vpop.f32.mrb[0].mxu0
    %v300 = vadd.f32 0.0, %v299
    %301 = vmatprep.mubr.f32.mxu0 0.0
    %302 = vmatmul.mubr.f32.gmra.mrb[0].mxu0 %v164
    %v303 = vpop.f32.mrb[0].mxu0
    %v304 = vadd.f32 0.0, %v303
    %v305 = vpop.f32.mrb[0].mxu0
    %v306 = vadd.f32 0.0, %v305
    %307 = vmatprep.mubr.f32.mxu0 0.0
    %308 = vmatmul.mubr.f32.gmra.mrb[0].mxu0 %v165
    %v309 = vpop.f32.mrb[0].mxu0
    %v310 = vadd.f32 0.0, %v309
    %v311 = vpop.f32.mrb[0].mxu0
    %v312 = vadd.f32 0.0, %v311
    %313 = vmatprep.mubr.f32.mxu0 0.0
    %314 = vmatmul.mubr.f32.gmra.mrb[0].mxu0 %v166
    %v315 = vpop.f32.mrb[0].mxu0
    %v316 = vadd.f32 0.0, %v315
    %v317 = vpop.f32.mrb[0].mxu0
    %v318 = vadd.f32 0.0, %v317
    %319 = vmatprep.mubr.f32.mxu0 0.0
    %320 = vmatmul.mubr.f32.gmra.mrb[0].mxu0 %v167
    %v321 = vpop.f32.mrb[0].mxu0
    %v322 = vadd.f32 0.0, %v321
    %v323 = vpop.f32.mrb[0].mxu0
    %v324 = vadd.f32 0.0, %v323
    %325 = vmatprep.mubr.f32.mxu0 0.0
    %326 = vmatmul.mubr.f32.gmra.mrb[0].mxu0 %v168
    %v327 = vpop.f32.mrb[0].mxu0
    %v328 = vadd.f32 0.0, %v327
    %v329 = vpop.f32.mrb[0].mxu0
    %v330 = vadd.f32 0.0, %v329
    %331 = vmatprep.mubr.f32.mxu0 0.0
    %332 = vmatmul.mubr.f32.gmra.mrb[0].mxu0 %v169
    %v333 = vpop.f32.mrb[0].mxu0
    %v334 = vadd.f32 0.0, %v333
    %v335 = vpop.f32.mrb[0].mxu0
    %v336 = vadd.f32 0.0, %v335
    %337 = vmatprep.mubr.f32.mxu0 0.0
    %338 = vmatmul.mubr.f32.gmra.mrb[0].mxu0 %v170
    %v339 = vpop.f32.mrb[0].mxu0
    %v340 = vadd.f32 0.0, %v339
    %v341 = vpop.f32.mrb[0].mxu0
    %v342 = vadd.f32 0.0, %v341
    %343 = vmatprep.mubr.f32.mxu0 0.0
    %344 = vmatmul.mubr.f32.gmra.mrb[0].mxu0 %v171
    %v345 = vpop.f32.mrb[0].mxu0
    %v346 = vadd.f32 0.0, %v345
    %v347 = vpop.f32.mrb[0].mxu0
    %v348 = vadd.f32 0.0, %v347
    %349 = vmatprep.mubr.f32.mxu0 0.0
    %350 = vmatmul.mubr.f32.gmra.mrb[0].mxu0 %v172
    %v351 = vpop.f32.mrb[0].mxu0
    %v352 = vadd.f32 0.0, %v351
    %v353 = vpop.f32.mrb[0].mxu0
    %v354 = vadd.f32 0.0, %v353
    %355 = vmatprep.mubr.f32.mxu0 0.0
    %356 = vmatmul.mubr.f32.gmra.mrb[0].mxu0 %v173
    %v357 = vpop.f32.mrb[0].mxu0
    %v358 = vadd.f32 0.0, %v357
    %v359 = vpop.f32.mrb[0].mxu0
    %v360 = vadd.f32 0.0, %v359
    %361 = vmatprep.mubr.f32.mxu0 0.0
    %362 = vmatmul.mubr.f32.gmra.mrb[0].mxu0 %v174
    %v363 = vpop.f32.mrb[0].mxu0
    %v364 = vadd.f32 0.0, %v363
    %v365 = vpop.f32.mrb[0].mxu0
    %v366 = vadd.f32 0.0, %v365
    %367 = vdwg.mxu0
    %368 = vmatprep.subr.mxu0 0.0
    %369 = vmatpush1.xpose.msra.mxu0 %v274
    %370 = vmatprep.subr.mxu0 0.0
    %371 = vmatpush1.xpose.msra.mxu0 %v280
    %372 = vmatprep.subr.mxu0 0.0
    %373 = vmatpush1.xpose.msra.mxu0 %v286
    %374 = vmatprep.subr.mxu0 0.0
    %375 = vmatpush1.xpose.msra.mxu0 %v292
    %376 = vmatprep.subr.mxu0 0.0
    %377 = vmatpush1.xpose.msra.mxu0 %v298
    %378 = vmatprep.subr.mxu0 0.0
    %379 = vmatpush1.xpose.msra.mxu0 %v304
    %380 = vmatprep.subr.mxu0 0.0
    %381 = vmatpush1.xpose.msra.mxu0 %v310
    %382 = vmatprep.subr.mxu0 0.0
    %383 = vmatpush1.xpose.msra.mxu0 %v316
    %384 = vmatprep.subr.mxu0 0.0
    %385 = vmatpush1.xpose.msra.mxu0 %v322
    %386 = vmatprep.subr.mxu0 0.0
    %387 = vmatpush1.xpose.msra.mxu0 %v328
    %388 = vmatprep.subr.mxu0 0.0
    %389 = vmatpush1.xpose.msra.mxu0 %v334
    %390 = vmatprep.subr.mxu0 0.0
    %391 = vmatpush1.xpose.msra.mxu0 %v340
    %392 = vmatprep.subr.mxu0 0.0
    %393 = vmatpush1.xpose.msra.mxu0 %v346
    %394 = vmatprep.subr.mxu0 0.0
    %395 = vmatpush1.xpose.msra.mxu0 %v352
    %396 = vmatprep.subr.mxu0 0.0
    %397 = vmatpush1.xpose.msra.mxu0 %v358
    %398 = vmatprep.subr.mxu0 0.0
    %399 = vmatpush1.xpose.msra.mxu0 %v364
    %400 = vmatprep.subr.mxu0 0.0
    %401 = vmatpush1.xpose.msra.mxu0 0.0
    %402 = vmatprep.subr.mxu0 0.0
    %403 = vmatpush1.xpose.msra.mxu0 0.0
    %404 = vmatprep.subr.mxu0 0.0
    %405 = vmatpush1.xpose.msra.mxu0 0.0
    %406 = vmatprep.subr.mxu0 0.0
    %407 = vmatpush1.xpose.msra.mxu0 0.0
    %408 = vmatprep.subr.mxu0 0.0
    %409 = vmatpush1.xpose.msra.mxu0 0.0
    %410 = vmatprep.subr.mxu0 0.0
    %411 = vmatpush1.xpose.msra.mxu0 0.0
    %412 = vmatprep.subr.mxu0 0.0
    %413 = vmatpush1.xpose.msra.mxu0 0.0
    %414 = vmatprep.subr.mxu0 0.0
    %415 = vmatpush1.xpose.msra.mxu0 0.0
    %416 = vmatprep.subr.mxu0 0.0
    %417 = vmatpush1.xpose.msra.mxu0 0.0
    %418 = vmatprep.subr.mxu0 0.0
    %419 = vmatpush1.xpose.msra.mxu0 0.0
    %420 = vmatprep.subr.mxu0 0.0
    %421 = vmatpush1.xpose.msra.mxu0 0.0
    %422 = vmatprep.subr.mxu0 0.0
    %423 = vmatpush1.xpose.msra.mxu0 0.0
    %424 = vmatprep.subr.mxu0 0.0
    %425 = vmatpush1.xpose.msra.mxu0 0.0
    %426 = vmatprep.subr.mxu0 0.0
    %427 = vmatpush1.xpose.msra.mxu0 0.0
    %428 = vmatprep.subr.mxu0 0.0
    %429 = vmatpush1.xpose.msra.mxu0 0.0
    %430 = vmatprep.subr.mxu0 0.0
    %431 = vmatpush1.xpose.msra.mxu0 0.0
    %432 = vmatprep.mubr.f32.mxu0 0.0
    %433 = vmatmul.mubr.f32.gmra.mrb[0].mxu0 %v158
    %v434 = vpop.f32.mrb[0].mxu0
    %v435 = vadd.f32 0.0, %v434
    %v436 = vpop.f32.mrb[0].mxu0
    %437 = vdwg.mxu0
    %438 = vmax.xlane.f32.xlu0 %v435
    %v439 = vpop.xlane.xlu0 %438
    %v440 = vsub.f32 %v435, %v439
    %v441 = vmul.f32 %v440, 1.442695
    %v442 = vpow.pop %v441
    %443 = vadd.xlane.f32.xlu0 %v442
    %v444 = vpop.xlane.xlu0 %443
    %v445 = vrcp.pop %v444
    %v446 = vmul.f32 %v442, %v445
    %447 = vmatprep.subr.mxu0 0.0
    %448 = vmatpush1.msra.mxu0 %v276
    %449 = vmatprep.subr.mxu0 0.0
    %450 = vmatpush1.msra.mxu0 %v282
    %451 = vmatprep.subr.mxu0 0.0
    %452 = vmatpush1.msra.mxu0 %v288
    %453 = vmatprep.subr.mxu0 0.0
    %454 = vmatpush1.msra.mxu0 %v294
    %455 = vmatprep.subr.mxu0 0.0
    %456 = vmatpush1.msra.mxu0 %v300
    %457 = vmatprep.subr.mxu0 0.0
    %458 = vmatpush1.msra.mxu0 %v306
    %459 = vmatprep.subr.mxu0 0.0
    %460 = vmatpush1.msra.mxu0 %v312
    %461 = vmatprep.subr.mxu0 0.0
    %462 = vmatpush1.msra.mxu0 %v318
    %463 = vmatprep.subr.mxu0 0.0
    %464 = vmatpush1.msra.mxu0 %v324
    %465 = vmatprep.subr.mxu0 0.0
    %466 = vmatpush1.msra.mxu0 %v330
    %467 = vmatprep.subr.mxu0 0.0
    %468 = vmatpush1.msra.mxu0 %v336
    %469 = vmatprep.subr.mxu0 0.0
    %470 = vmatpush1.msra.mxu0 %v342
    %471 = vmatprep.subr.mxu0 0.0
    %472 = vmatpush1.msra.mxu0 %v348
    %473 = vmatprep.subr.mxu0 0.0
    %474 = vmatpush1.msra.mxu0 %v354
    %475 = vmatprep.subr.mxu0 0.0
    %476 = vmatpush1.msra.mxu0 %v360
    %477 = vmatprep.subr.mxu0 0.0
    %478 = vmatpush1.msra.mxu0 %v366
    %479 = vmatprep.subr.mxu0 0.0
    %480 = vmatpush1.msra.mxu0 0.0
    %481 = vmatprep.subr.mxu0 0.0
    %482 = vmatpush1.msra.mxu0 0.0
    %483 = vmatprep.subr.mxu0 0.0
    %484 = vmatpush1.msra.mxu0 0.0
    %485 = vmatprep.subr.mxu0 0.0
    %486 = vmatpush1.msra.mxu0 0.0
    %487 = vmatprep.subr.mxu0 0.0
    %488 = vmatpush1.msra.mxu0 0.0
    %489 = vmatprep.subr.mxu0 0.0
    %490 = vmatpush1.msra.mxu0 0.0
    %491 = vmatprep.subr.mxu0 0.0
    %492 = vmatpush1.msra.mxu0 0.0
    %493 = vmatprep.subr.mxu0 0.0
    %494 = vmatpush1.msra.mxu0 0.0
    %495 = vmatprep.subr.mxu0 0.0
    %496 = vmatpush1.msra.mxu0 0.0
    %497 = vmatprep.subr.mxu0 0.0
    %498 = vmatpush1.msra.mxu0 0.0
    %499 = vmatprep.subr.mxu0 0.0
    %500 = vmatpush1.msra.mxu0 0.0
    %501 = vmatprep.subr.mxu0 0.0
    %502 = vmatpush1.msra.mxu0 0.0
    %503 = vmatprep.subr.mxu0 0.0
    %504 = vmatpush1.msra.mxu0 0.0
    %505 = vmatprep.subr.mxu0 0.0
    %506 = vmatpush1.msra.mxu0 0.0
    %507 = vmatprep.subr.mxu0 0.0
    %508 = vmatpush1.msra.mxu0 0.0
    %509 = vmatprep.subr.mxu0 0.0
    %510 = vmatpush1.msra.mxu0 0.0
    %511 = vmatprep.mubr.f32.mxu0 0.0
    %512 = vmatmul.mubr.f32.gmra.mrb[0].mxu0 %v446
    %v513 = vpop.f32.mrb[0].mxu0
    %v514 = vadd.f32 0.0, %v513
    %v515 = vpop.f32.mrb[0].mxu0
    %516 = vdwg.mxu0
    %517 = vst [vmem:[#allocation10] sm:$0xff] %v514
    // Predicated region
    $region34: #{tpu_custom_call.1} parent=1 // pred_check
      _
    $region35: #{tpu_custom_call.1} parent=1 // pred_check_branch
      %519 = sbr.rel (0) target = $region37
    $region36: #{tpu_custom_call.1} parent=1 // pred_region
      %s521 = ssub.s32 128, 128
      %522 = vsyncadd [#allocation4], %s521
      %s524 = sshll.u32 [#allocation10], 4
      %s525 = int_to_ptr.vmem [resolvable:$true] %s524
      %527 = dma.vmem_to_hbm [thread:$0]  %s525, 128, %s4, [#allocation4]
    $region37: #{tpu_custom_call.1} parent=1 // pred_fallthru
      _
    // Predicated region
    $region38: #{tpu_custom_call.1} parent=1 // pred_check
      _
    $region39: #{tpu_custom_call.1} parent=1 // pred_check_branch
      %529 = sbr.rel (0) target = $region41
    $region40: #{tpu_custom_call.1} parent=1 // pred_region
      %530 = dma.done [#allocation4], 128
    $region41: #{tpu_custom_call.1} parent=1 // pred_fallthru
      _
    %531 = vsyncpa [#allocation3], 1
    %532 = vsyncpa [#allocation6], 1
    %533 = vsyncpa [#allocation9], 1
    %534 = vsyncpa [#allocation4], 1

</llo_original>
